<compile_context>
chip_gen: v7x
topology: tpu7x:2x2x1
jax: 0.10.0
libtpu: 0.0.40
codegen_flags: <defaults>
</compile_context>

<pallas_src>
import functools

import jax
import jax.numpy as jnp
from jax.experimental import pallas as pl
from jax.experimental.pallas import tpu as pltpu

EPS = 1e-5
_VMEM_LIMIT = 32 * 1024 * 1024          # safe on every generation (do NOT raise for v7x)
_PASS1_TARGET_BYTES = 4 * 1024 * 1024   # ~4 MiB stats input tile (x double-buffered = 8 MiB)
_PASS2_TARGET_BYTES = 4 * 1024 * 1024   # ~4 MiB normalize tile (in+out double-buffered = 16 MiB)
_FUSE_LIMIT_BYTES = 2 * 1024 * 1024     # keep x resident in VMEM below this (f32 working set)


def _cdiv(a, b):
    return -(-a // b)


def _lane_tile(extent, preferred):
    """Lane (last-dim) block size: the full extent if it is small, else a multiple
    of 128 (the last grid tile is then padded; stats mask it, normalize ignores it)."""
    if extent <= preferred:
        return extent
    return max(128, (preferred // 128) * 128)


def _sublane_align(dtype):
    # f32 -> 8, bf16 -> 16, int8/fp8 -> 32 rows per packed sublane tile.
    return max(8, 32 // jnp.dtype(dtype).itemsize)


# ----------------------------- pass 1: statistics -----------------------------

def _stats_kernel(x_ref, psum_ref, psq_ref, *, lanes_total, lane_tile):
    """Per-row partial sum / sum-of-squares of one (rows, lane_tile) tile.

    Each grid point writes its own partial output (no cross-step accumulation),
    so both grid axes are 'parallel' (megacore-friendly on v7x)."""
    x = x_ref[...].astype(jnp.float32)                         # (rt, lt)
    if lanes_total % lane_tile != 0:
        # Last lane tile is padded: mask the padding out of the statistics.
        j = pl.program_id(1)
        valid = lanes_total - j * lane_tile                    # >= lane_tile except last tile
        lane_ids = jax.lax.broadcasted_iota(jnp.int32, x.shape, 1)
        mask = lane_ids < valid
        xs = jnp.where(mask, x, 0.0)
        xq = jnp.where(mask, x * x, 0.0)
    else:
        xs = x
        xq = x * x
    psum_ref[...] = jnp.sum(xs, axis=1, keepdims=True)         # (rt, 1)
    psq_ref[...] = jnp.sum(xq, axis=1, keepdims=True)          # (rt, 1)


def _compute_stats(x, *, row_tile=None, lane_tile=None):
    """Per-component means mu (4,) and scalar quaternion variance of x (N,C,H,W)."""
    N, C, H, W = x.shape
    Cq = C // 4
    Lq = Cq * H * W            # elements per (batch, component) row
    R1 = N * 4
    x1 = x.reshape(R1, Lq)     # free contiguous view: row r = (n, q)

    itemsize = jnp.dtype(x.dtype).itemsize
    sub_align = _sublane_align(x.dtype)
    lt = lane_tile if lane_tile is not None else _lane_tile(Lq, 131072)
    pref_rows = (_PASS1_TARGET_BYTES // itemsize) // lt
    pref_rows = max(sub_align, (pref_rows // sub_align) * sub_align)
    rt = row_tile if row_tile is not None else (R1 if R1 <= pref_rows else pref_rows)
    gr, gl = _cdiv(R1, rt), _cdiv(Lq, lt)

    psum, psq = pl.pallas_call(
        functools.partial(_stats_kernel, lanes_total=Lq, lane_tile=lt),
        out_shape=(
            jax.ShapeDtypeStruct((gr, gl, rt, 1), jnp.float32),
            jax.ShapeDtypeStruct((gr, gl, rt, 1), jnp.float32),
        ),
        grid=(gr, gl),
        in_specs=[pl.BlockSpec((rt, lt), lambda i, j: (i, j))],
        out_specs=(
            pl.BlockSpec((None, None, rt, 1), lambda i, j: (i, j, 0, 0)),
            pl.BlockSpec((None, None, rt, 1), lambda i, j: (i, j, 0, 0)),
        ),
        compiler_params=pltpu.CompilerParams(
            dimension_semantics=("parallel", "parallel"),
            vmem_limit_bytes=_VMEM_LIMIT,
        ),
    )(x1)

    # Tiny XLA glue: fold lane tiles, drop padded rows, fold rows -> components.
    row_sum = psum.sum(axis=(1, 3)).reshape(gr * rt)[:R1]       # (R1,)
    row_sq = psq.sum(axis=(1, 3)).reshape(gr * rt)[:R1]         # (R1,)
    inv_count = 1.0 / float(N * Lq)
    mu = row_sum.reshape(N, 4).sum(axis=0) * inv_count          # (4,) per-component mean
    ex2 = row_sq.reshape(N, 4).sum(axis=0) * inv_count          # (4,) E[x_q^2]
    # NOTE: E[x^2] - mu^2 form (single read of x), accumulated in f32; the fused
    # small-input path below uses the exact (x - mu)^2 form instead.
    var = jnp.sum(ex2 - mu * mu)                                # ()
    return mu, var


# ----------------------------- pass 2: normalize -----------------------------

def _norm_kernel(x_ref, a_ref, b_ref, o_ref):
    # x/o: (bn, lt) tile of the lane-dense (N, C*H*W) view; a/b: (1, lt) lane vectors.
    x = x_ref[...].astype(jnp.float32)
    o_ref[...] = (a_ref[...] * x + b_ref[...]).astype(o_ref.dtype)


def _apply_channel_affine(x, a_c, b_c, *, row_tile=None, lane_tile=None):
    """out[n, c, h, w] = a_c[c] * x[n, c, h, w] + b_c[c], lane-dense layout."""
    N, C, H, W = x.shape
    HW = H * W
    L = C * HW
    x2 = x.reshape(N, L)                                        # free contiguous view
    a_lane = jnp.repeat(a_c.astype(jnp.float32), HW).reshape(1, L)
    b_lane = jnp.repeat(b_c.astype(jnp.float32), HW).reshape(1, L)

    itemsize = jnp.dtype(x.dtype).itemsize
    sub_align = _sublane_align(x.dtype)
    lt = lane_tile if lane_tile is not None else _lane_tile(L, 65536)
    pref_rows = (_PASS2_TARGET_BYTES // itemsize) // lt
    pref_rows = max(sub_align, (pref_rows // sub_align) * sub_align)
    bn = row_tile if row_tile is not None else (N if N <= pref_rows else pref_rows)

    out2 = pl.pallas_call(
        _norm_kernel,
        out_shape=jax.ShapeDtypeStruct((N, L), x.dtype),
        grid=(_cdiv(N, bn), _cdiv(L, lt)),
        in_specs=[
            pl.BlockSpec((bn, lt), lambda i, j: (i, j)),
            pl.BlockSpec((1, lt), lambda i, j: (0, j)),
            pl.BlockSpec((1, lt), lambda i, j: (0, j)),
        ],
        out_specs=pl.BlockSpec((bn, lt), lambda i, j: (i, j)),
        compiler_params=pltpu.CompilerParams(
            dimension_semantics=("parallel", "parallel"),
            vmem_limit_bytes=_VMEM_LIMIT,
        ),
    )(x2, a_lane, b_lane)
    return out2.reshape(N, C, H, W)


# ------------------- fused single-pass kernel for small x --------------------

def _fused_kernel(x_ref, g_ref, beta_ref, o_ref, mu_ref, var_ref, *, inv_count, eps):
    x = x_ref[...].astype(jnp.float32)                          # (N, 4, Lq) resident in VMEM
    s = jnp.sum(jnp.sum(x, axis=2, keepdims=True), axis=0, keepdims=True)   # (1, 4, 1)
    mu = s * inv_count
    d = x - mu                                                  # exact (x - mu) form
    dsq = jnp.sum(d * d, axis=1, keepdims=True)                 # (N, 1, Lq)
    v = jnp.sum(jnp.sum(dsq, axis=2, keepdims=True), axis=0, keepdims=True) * inv_count
    inv_denom = jax.lax.rsqrt(v + eps)                          # (1, 1, 1)
    o_ref[...] = (g_ref[...] * inv_denom * d + beta_ref[...]).astype(o_ref.dtype)
    mu_ref[...] = mu
    var_ref[...] = v


def _fused_forward(x, gamma, beta, eps):
    N, C, H, W = x.shape
    Cq = C // 4
    HW = H * W
    Lq = Cq * HW
    x3 = x.reshape(N, 4, Lq)
    g_lane = jnp.repeat(gamma.reshape(Cq).astype(jnp.float32), HW).reshape(1, 1, Lq)
    beta_lane = jnp.repeat(beta.reshape(4, Cq).astype(jnp.float32), HW, axis=1).reshape(1, 4, Lq)
    inv_count = 1.0 / float(N * Lq)

    out3, mu3, var3 = pl.pallas_call(
        functools.partial(_fused_kernel, inv_count=inv_count, eps=eps),
        out_shape=(
            jax.ShapeDtypeStruct((N, 4, Lq), x.dtype),
            jax.ShapeDtypeStruct((1, 4, 1), jnp.float32),
            jax.ShapeDtypeStruct((1, 1, 1), jnp.float32),
        ),
        grid=(1,),
        in_specs=[
            pl.BlockSpec((N, 4, Lq), lambda i: (0, 0, 0)),
            pl.BlockSpec((1, 1, Lq), lambda i: (0, 0, 0)),
            pl.BlockSpec((1, 4, Lq), lambda i: (0, 0, 0)),
        ],
        out_specs=(
            pl.BlockSpec((N, 4, Lq), lambda i: (0, 0, 0)),
            pl.BlockSpec((1, 4, 1), lambda i: (0, 0, 0)),
            pl.BlockSpec((1, 1, 1), lambda i: (0, 0, 0)),
        ),
        compiler_params=pltpu.CompilerParams(
            dimension_semantics=("arbitrary",),
            vmem_limit_bytes=_VMEM_LIMIT,
        ),
    )(x3, g_lane, beta_lane)
    return out3.reshape(N, C, H, W), mu3.reshape(4), var3.reshape(())


# --------------------------------- wrappers -----------------------------------

def quaternion_batchnorm2d(x, gamma, beta, eps=EPS, *, force_two_pass=False,
                           stats_tiles=None, norm_tiles=None):
    """Training-mode forward of QuaternionBatchNorm2d.

    Args:
      x:     (N, C, H, W), C divisible by 4 (NCHW, like PyTorch)
      gamma: (1, C//4, 1, 1)
      beta:  (1, C, 1, 1)
    Returns:
      out (N, C, H, W), mu (4,), var ()  — mu/var feed the moving-average updates.
    """
    N, C, H, W = x.shape
    assert C % 4 == 0, "channels must be divisible by 4"
    Cq = C // 4
    Lq = Cq * H * W
    eps = float(eps)

    use_fused = (N * 4 * Lq * 4 <= _FUSE_LIMIT_BYTES and not force_two_pass
                 and stats_tiles is None and norm_tiles is None)
    if use_fused:
        # Small activation: keep x resident in VMEM -> one HBM read + one write
        # instead of read-twice + write-once.
        return _fused_forward(x, gamma, beta, eps)

    st = stats_tiles if stats_tiles is not None else (None, None)
    mu, var = _compute_stats(x, row_tile=st[0], lane_tile=st[1])

    # Fused per-channel affine constants (tiny O(C) glue in XLA):
    #   out = a_c * x + b_c,  a_c = gamma_cq / sqrt(var+eps),  b_c = beta_c - a_c * mu_q
    inv_denom = jax.lax.rsqrt(var + eps)
    a_c = jnp.tile(gamma.reshape(Cq).astype(jnp.float32), 4) * inv_denom     # (C,)
    b_c = beta.reshape(C).astype(jnp.float32) - a_c * jnp.repeat(mu, Cq)     # (C,)

    nt = norm_tiles if norm_tiles is not None else (None, None)
    out = _apply_channel_affine(x, a_c, b_c, row_tile=nt[0], lane_tile=nt[1])
    return out, mu, var


def quaternion_batchnorm2d_eval(x, gamma, beta, moving_mean, moving_var, eps=EPS):
    """Eval-mode forward (uses the moving statistics); reuses the normalize kernel."""
    N, C, H, W = x.shape
    Cq = C // 4
    eps = float(eps)
    inv_denom = jax.lax.rsqrt(moving_var.reshape(()).astype(jnp.float32) + eps)
    a_c = jnp.tile(gamma.reshape(Cq).astype(jnp.float32), 4) * inv_denom
    b_c = (beta.reshape(C).astype(jnp.float32)
           - a_c * jnp.repeat(moving_mean.astype(jnp.float32), Cq))
    return _apply_channel_affine(x, a_c, b_c)


def moving_average_update(statistic, curr_value, momentum):
    # Functional equivalent of the in-place torch buffer update.
    return (1.0 - momentum) * statistic + momentum * curr_value


# ------------------------- pure-JAX references (tests) ------------------------

def reference_forward(x, gamma, beta, eps=EPS):
    N, C, H, W = x.shape
    Cq = C // 4
    comps = [x[:, q * Cq:(q + 1) * Cq] for q in range(4)]
    mus = [jnp.mean(c) for c in comps]
    deltas = [c - m for c, m in zip(comps, mus)]
    var = jnp.mean(sum(d * d for d in deltas))
    denom = jnp.sqrt(var + eps)
    betas = [beta[:, q * Cq:(q + 1) * Cq] for q in range(4)]
    outs = [gamma * (d / denom) + b for d, b in zip(deltas, betas)]
    return jnp.concatenate(outs, axis=1), jnp.stack(mus), var


def reference_eval(x, gamma, beta, moving_mean, moving_var, eps=EPS):
    N, C, H, W = x.shape
    Cq = C // 4
    denom = jnp.sqrt(moving_var.reshape(()) + eps)
    outs = []
    for q in range(4):
        xq = x[:, q * Cq:(q + 1) * Cq]
        bq = beta[:, q * Cq:(q + 1) * Cq]
        outs.append(gamma * ((xq - moving_mean[q]) / denom) + bq)
    return jnp.concatenate(outs, axis=1)


if __name__ == "__main__":
    key = jax.random.PRNGKey(0)

    # Module config: num_features (channels) = 8  ->  num_features // 4 = 2
    N, C, H, W = 2, 8, 16, 16
    Cq = C // 4
    gamma_init = 1.5
    momentum = 0.1

    x = jax.random.normal(key, (N, C, H, W), dtype=jnp.float32)
    gamma = jnp.full((1, Cq, 1, 1), gamma_init, dtype=jnp.float32)
    beta = jnp.zeros((1, C, 1, 1), dtype=jnp.float32)
    moving_mean = jnp.zeros((4,), dtype=jnp.float32)
    moving_var = jnp.ones((1,), dtype=jnp.float32)

    qbn = jax.jit(quaternion_batchnorm2d,
                  static_argnames=("force_two_pass", "stats_tiles", "norm_tiles"))

    ref_out, ref_mu, ref_var = reference_forward(x, gamma, beta)

    # 1) Auto dispatch (small input -> fused single-pass kernel, x resident in VMEM).
    out, mu, var = qbn(x, gamma, beta)
    jax.block_until_ready(out)
    assert jnp.allclose(out, ref_out, atol=1e-5, rtol=1e-5), "fused output mismatch"
    assert jnp.allclose(mu, ref_mu, atol=1e-5), "fused mean mismatch"
    assert jnp.allclose(var, ref_var, atol=1e-5, rtol=1e-5), "fused variance mismatch"

    # 2) Two-pass tiled path (parallel stats kernel + lane-dense normalize kernel).
    out2, mu2, var2 = qbn(x, gamma, beta, force_two_pass=True)
    jax.block_until_ready(out2)
    assert jnp.allclose(out2, ref_out, atol=1e-5, rtol=1e-5), "two-pass output mismatch"
    assert jnp.allclose(mu2, ref_mu, atol=1e-5), "two-pass mean mismatch"
    assert jnp.allclose(var2, ref_var, atol=1e-5, rtol=1e-5), "two-pass variance mismatch"

    # 3) Non-128-divisible spatial shape with small forced tiles: exercises the
    #    cdiv grids, in-kernel lane masking (stats), padded-row discard, and the
    #    harmless edge padding of the normalize pass.
    N3, H3, W3 = 3, 10, 10
    x3 = jax.random.normal(jax.random.PRNGKey(1), (N3, C, H3, W3), dtype=jnp.float32)
    out3, mu3, var3 = qbn(x3, gamma, beta, force_two_pass=True,
                          stats_tiles=(8, 128), norm_tiles=(None, 256))
    jax.block_until_ready(out3)
    r_out3, r_mu3, r_var3 = reference_forward(x3, gamma, beta)
    assert jnp.allclose(out3, r_out3, atol=1e-5, rtol=1e-5), "edge-tile output mismatch"
    assert jnp.allclose(mu3, r_mu3, atol=1e-5), "edge-tile mean mismatch"
    assert jnp.allclose(var3, r_var3, atol=1e-5, rtol=1e-5), "edge-tile variance mismatch"

    # Moving-statistics updates (functional stand-in for the torch buffer copy_),
    # then the eval-mode forward, which reuses the normalize kernel.
    new_moving_mean = moving_average_update(moving_mean, mu, momentum)
    new_moving_var = moving_average_update(moving_var, var, momentum)
    out_eval = jax.jit(quaternion_batchnorm2d_eval)(
        x, gamma, beta, new_moving_mean, new_moving_var)
    jax.block_until_ready(out_eval)
    ref_eval_out = reference_eval(x, gamma, beta, new_moving_mean, new_moving_var)
    assert jnp.allclose(out_eval, ref_eval_out, atol=1e-5, rtol=1e-5), "eval output mismatch"

    print("KERNEL_OK")
</pallas_src>

<mosaic_0001>
module attributes {stable_mosaic.version = 11 : i64} {
  func.func @_fused_kernel(%arg0: i32, %arg1: memref<2x4x512xf32, #tpu.memory_space<vmem>>, %arg2: memref<1x1x512xf32, #tpu.memory_space<vmem>>, %arg3: memref<1x4x512xf32, #tpu.memory_space<vmem>>, %arg4: memref<2x4x512xf32, #tpu.memory_space<vmem>>, %arg5: memref<1x4x1xf32, #tpu.memory_space<vmem>>, %arg6: memref<1x1x1xf32, #tpu.memory_space<vmem>>) attributes {dimension_semantics = [#tpu.dimension_semantics<arbitrary>], iteration_bounds = array<i64: 1>, scalar_prefetch = 0 : i64, scratch_operands = 0 : i64, tpu.core_type = #tpu.core_type<tc>, window_params = [{pipeline_mode = #tpu.pipeline_mode<synchronous>, transform_indices = @transform_0, window_bounds = array<i64: 2, 4, 512>}, {pipeline_mode = #tpu.pipeline_mode<synchronous>, transform_indices = @transform_1, window_bounds = array<i64: 1, 1, 512>}, {pipeline_mode = #tpu.pipeline_mode<synchronous>, transform_indices = @transform_2, window_bounds = array<i64: 1, 4, 512>}, {pipeline_mode = #tpu.pipeline_mode<synchronous>, transform_indices = @transform_3, window_bounds = array<i64: 2, 4, 512>}, {pipeline_mode = #tpu.pipeline_mode<synchronous>, transform_indices = @transform_4, window_bounds = array<i64: 1, 4, 1>}, {pipeline_mode = #tpu.pipeline_mode<synchronous>, transform_indices = @transform_5, window_bounds = array<i64: 1, 1, 1>}]} {
    %c0 = arith.constant 0 : index
    %c0_0 = arith.constant 0 : index
    %c0_1 = arith.constant 0 : index
    %0 = vector.load %arg1[%c0, %c0_0, %c0_1] : memref<2x4x512xf32, #tpu.memory_space<vmem>>, vector<2x4x512xf32>
    %cst = arith.constant dense<0.000000e+00> : vector<2x4xf32>
    %1 = vector.multi_reduction <add>, %0, %cst [2] : vector<2x4x512xf32> to vector<2x4xf32>
    %2 = vector.shape_cast %1 : vector<2x4xf32> to vector<2x4x1xf32>
    %cst_2 = arith.constant dense<0.000000e+00> : vector<4x1xf32>
    %3 = vector.multi_reduction <add>, %2, %cst_2 [0] : vector<2x4x1xf32> to vector<4x1xf32>
    %4 = vector.shape_cast %3 : vector<4x1xf32> to vector<1x4x1xf32>
    %cst_3 = arith.constant 9.765625E-4 : f32
    %5 = vector.broadcast %cst_3 : f32 to vector<1x4x1xf32>
    %6 = arith.mulf %4, %5 : vector<1x4x1xf32>
    %7 = vector.broadcast %6 : vector<1x4x1xf32> to vector<2x4x512xf32>
    %8 = arith.subf %0, %7 : vector<2x4x512xf32>
    %9 = arith.mulf %8, %8 : vector<2x4x512xf32>
    %cst_4 = arith.constant dense<0.000000e+00> : vector<2x512xf32>
    %10 = vector.multi_reduction <add>, %9, %cst_4 [1] : vector<2x4x512xf32> to vector<2x512xf32>
    %11 = vector.shape_cast %10 : vector<2x512xf32> to vector<2x1x512xf32>
    %cst_5 = arith.constant dense<0.000000e+00> : vector<2x1xf32>
    %12 = vector.multi_reduction <add>, %11, %cst_5 [2] : vector<2x1x512xf32> to vector<2x1xf32>
    %13 = vector.shape_cast %12 : vector<2x1xf32> to vector<2x1x1xf32>
    %cst_6 = arith.constant dense<0.000000e+00> : vector<1x1xf32>
    %14 = vector.multi_reduction <add>, %13, %cst_6 [0] : vector<2x1x1xf32> to vector<1x1xf32>
    %15 = vector.shape_cast %14 : vector<1x1xf32> to vector<1x1x1xf32>
    %cst_7 = arith.constant 9.765625E-4 : f32
    %16 = vector.broadcast %cst_7 : f32 to vector<1x1x1xf32>
    %17 = arith.mulf %15, %16 : vector<1x1x1xf32>
    %cst_8 = arith.constant 9.99999974E-6 : f32
    %18 = vector.broadcast %cst_8 : f32 to vector<1x1x1xf32>
    %19 = arith.addf %17, %18 : vector<1x1x1xf32>
    %20 = math.rsqrt %19 : vector<1x1x1xf32>
    %c0_9 = arith.constant 0 : index
    %c0_10 = arith.constant 0 : index
    %c0_11 = arith.constant 0 : index
    %21 = vector.load %arg2[%c0_9, %c0_10, %c0_11] : memref<1x1x512xf32, #tpu.memory_space<vmem>>, vector<1x1x512xf32>
    %22 = vector.broadcast %20 : vector<1x1x1xf32> to vector<1x1x512xf32>
    %23 = arith.mulf %21, %22 : vector<1x1x512xf32>
    %24 = vector.broadcast %23 : vector<1x1x512xf32> to vector<2x4x512xf32>
    %25 = arith.mulf %24, %8 : vector<2x4x512xf32>
    %c0_12 = arith.constant 0 : index
    %c0_13 = arith.constant 0 : index
    %c0_14 = arith.constant 0 : index
    %26 = vector.load %arg3[%c0_12, %c0_13, %c0_14] : memref<1x4x512xf32, #tpu.memory_space<vmem>>, vector<1x4x512xf32>
    %27 = vector.broadcast %26 : vector<1x4x512xf32> to vector<2x4x512xf32>
    %28 = arith.addf %25, %27 : vector<2x4x512xf32>
    %c0_15 = arith.constant 0 : index
    %c0_16 = arith.constant 0 : index
    %c0_17 = arith.constant 0 : index
    %29 = vector.load %arg4[%c0_15, %c0_16, %c0_17] : memref<2x4x512xf32, #tpu.memory_space<vmem>>, vector<2x4x512xf32>
    tpu.vector_store %arg4[%c0_15, %c0_16, %c0_17], %28 {strides = array<i32>} : memref<2x4x512xf32, #tpu.memory_space<vmem>>, vector<2x4x512xf32>,
    %c0_18 = arith.constant 0 : index
    %c0_19 = arith.constant 0 : index
    %c0_20 = arith.constant 0 : index
    %30 = vector.load %arg5[%c0_18, %c0_19, %c0_20] : memref<1x4x1xf32, #tpu.memory_space<vmem>>, vector<1x4x1xf32>
    tpu.vector_store %arg5[%c0_18, %c0_19, %c0_20], %6 {strides = array<i32>} : memref<1x4x1xf32, #tpu.memory_space<vmem>>, vector<1x4x1xf32>,
    %c0_21 = arith.constant 0 : index
    %c0_22 = arith.constant 0 : index
    %c0_23 = arith.constant 0 : index
    %31 = vector.load %arg6[%c0_21, %c0_22, %c0_23] : memref<1x1x1xf32, #tpu.memory_space<vmem>>, vector<1x1x1xf32>
    tpu.vector_store %arg6[%c0_21, %c0_22, %c0_23], %17 {strides = array<i32>} : memref<1x1x1xf32, #tpu.memory_space<vmem>>, vector<1x1x1xf32>,
    return
  }
  func.func @transform_0(%arg0: i32) -> (i32, i32, i32) {
    %c0_i32 = arith.constant 0 : i32
    %c0_i32_0 = arith.constant 0 : i32
    %c0_i32_1 = arith.constant 0 : i32
    %c0_i32_2 = arith.constant 0 : i32
    return %c0_i32, %c0_i32_0, %c0_i32_1 : i32, i32, i32
  }
  func.func @transform_1(%arg0: i32) -> (i32, i32, i32) {
    %c0_i32 = arith.constant 0 : i32
    %c0_i32_0 = arith.constant 0 : i32
    %c0_i32_1 = arith.constant 0 : i32
    %c0_i32_2 = arith.constant 0 : i32
    return %c0_i32, %c0_i32_0, %c0_i32_1 : i32, i32, i32
  }
  func.func @transform_2(%arg0: i32) -> (i32, i32, i32) {
    %c0_i32 = arith.constant 0 : i32
    %c0_i32_0 = arith.constant 0 : i32
    %c0_i32_1 = arith.constant 0 : i32
    %c0_i32_2 = arith.constant 0 : i32
    return %c0_i32, %c0_i32_0, %c0_i32_1 : i32, i32, i32
  }
  func.func @transform_3(%arg0: i32) -> (i32, i32, i32) {
    %c0_i32 = arith.constant 0 : i32
    %c0_i32_0 = arith.constant 0 : i32
    %c0_i32_1 = arith.constant 0 : i32
    %c0_i32_2 = arith.constant 0 : i32
    return %c0_i32, %c0_i32_0, %c0_i32_1 : i32, i32, i32
  }
  func.func @transform_4(%arg0: i32) -> (i32, i32, i32) {
    %c0_i32 = arith.constant 0 : i32
    %c0_i32_0 = arith.constant 0 : i32
    %c0_i32_1 = arith.constant 0 : i32
    %c0_i32_2 = arith.constant 0 : i32
    return %c0_i32, %c0_i32_0, %c0_i32_1 : i32, i32, i32
  }
  func.func @transform_5(%arg0: i32) -> (i32, i32, i32) {
    %c0_i32 = arith.constant 0 : i32
    %c0_i32_0 = arith.constant 0 : i32
    %c0_i32_1 = arith.constant 0 : i32
    %c0_i32_2 = arith.constant 0 : i32
    return %c0_i32, %c0_i32_0, %c0_i32_1 : i32, i32, i32
  }
}

</mosaic_0001>

<llo_original>
// kernel: quaternion_batchnorm2d.1
$region0: #{quaternion_batchnorm2d.1}
  #allocation0 [shape = 'u32[]', space=smem, size = 0x4, offset = 0x4, fixed_abs, tag = 'smem constant byte address 0x4 - core index']
  #allocation1 [shape = 'u32[144,128]{1,0:T(1,128)}', space=vmem, size = 0x12000, scoped, tag = 'internal scratch']
  %s0 = inlined_call_operand.vmem [shape: f32[2,4,512], index: 0, kind: input, shape index: {}]
  %s1 = inlined_call_operand.vmem [shape: f32[1,1,512], index: 1, kind: input, shape index: {}]
  %s2 = inlined_call_operand.vmem [shape: f32[1,4,512], index: 2, kind: input, shape index: {}]
  %s3 = inlined_call_operand.vmem [shape: f32[2,4,512], index: 3, kind: output, shape index: {0}]
  %s4 = inlined_call_operand.vmem [shape: f32[1,4,1], index: 4, kind: output, shape index: {1}]
  %s5 = inlined_call_operand.hbm [shape: f32[1,1,1], index: 5, kind: output, shape index: {2}]
  %6 = xla_tuple %s3, %s4, %s5
  %s7 = sld [smem:[#allocation0]]
  $region38: #{quaternion_batchnorm2d.1} parent=0
    _
  %s9 = ssub.s32 1, %s7
  %s10 = scalar_select 0, %s9, %s7
  $region1: #{quaternion_batchnorm2d.1} parent=0
    #allocation2 [shape = 'u8[512]{0}', space=vmem, size = 0x400, scoped, tag = 'output window, operand 2, single buffered']
    #allocation3 [shape = 's32[1]{0}', space=sflag, size = 0x4, scoped, tag = 'scoped memory for quaternion_batchnorm2d.1']
    %11 = vsyncpa [#allocation3], 0
    // Predicated region
    $region2: #{quaternion_batchnorm2d.1} parent=1 // pred_check
      _
    $region3: #{quaternion_batchnorm2d.1} parent=1 // pred_check_branch
      %13 = sbr.rel (0) target = $region5
    $region4: #{quaternion_batchnorm2d.1} parent=1 // pred_region
      _
    $region5: #{quaternion_batchnorm2d.1} parent=1 // pred_fallthru
      _
    // Predicated region
    $region6: #{quaternion_batchnorm2d.1} parent=1 // pred_check
      _
    $region7: #{quaternion_batchnorm2d.1} parent=1 // pred_check_branch
      %15 = sbr.rel (0) target = $region9
    $region8: #{quaternion_batchnorm2d.1} parent=1 // pred_region
      _
    $region9: #{quaternion_batchnorm2d.1} parent=1 // pred_fallthru
      _
    // Predicated region
    $region10: #{quaternion_batchnorm2d.1} parent=1 // pred_check
      _
    $region11: #{quaternion_batchnorm2d.1} parent=1 // pred_check_branch
      %17 = sbr.rel (0) target = $region13
    $region12: #{quaternion_batchnorm2d.1} parent=1 // pred_region
      _
    $region13: #{quaternion_batchnorm2d.1} parent=1 // pred_fallthru
      _
    %v18 = vld [vmem:[%s0] sm:$0xff]
    %v19 = vld [vmem:[%s0 + $0x8] sm:$0xff]
    %v20 = vld [vmem:[%s0 + $0x10] sm:$0xff]
    %v21 = vld [vmem:[%s0 + $0x18] sm:$0xff]
    %v26 = vcombine.high %v18, %v18
    %v27 = vcombine.high %v19, %v19
    %v28 = vcombine.high %v20, %v20
    %v29 = vcombine.high %v21, %v21
    %vm34 = vcmask 1043456
    %v35 = vsel %vm34, %v18, 0.0
    %v36 = vsel %vm34, %v26, 0.0
    %v37 = vadd.f32 %v35, %v36
    %v38 = vsel %vm34, %v19, 0.0
    %v39 = vadd.f32 %v37, %v38
    %v40 = vsel %vm34, %v27, 0.0
    %v41 = vadd.f32 %v39, %v40
    %42 = vadd.xlane.f32.xlu0 %v41
    %v43 = vpop.xlane.xlu0 %42
    %v44 = vsel %vm34, %v20, 0.0
    %v45 = vsel %vm34, %v28, 0.0
    %v46 = vadd.f32 %v44, %v45
    %v47 = vsel %vm34, %v21, 0.0
    %v48 = vadd.f32 %v46, %v47
    %v49 = vsel %vm34, %v29, 0.0
    %v50 = vadd.f32 %v48, %v49
    %51 = vadd.xlane.f32.xlu0 %v50
    %v52 = vpop.xlane.xlu0 %51
    %v53 = vsel %vm34, %v43, 0.0
    %v54 = vsel %vm34, %v52, 0.0
    %v55 = vadd.f32 %v53, %v54
    %v56 = vmul.f32 %v55, 0.0009765625
    %v59 = vunpack.c.l.s4 839922192
    %v60 = vunpack.c.0.s8 %v59
    %v61 = vlaneseq
    %v62 = vshrl.u32 %v61, 7
    %v63 = vsub.s32 %v60, %v62
    %v64 = vrot.slane %v56, %v63
    %v66 = vsub.f32 %v18, %v64
    %v67 = vsub.f32 %v19, %v64
    %v68 = vsub.f32 %v20, %v64
    %v69 = vsub.f32 %v21, %v64
    %v70 = vmul.f32 %v66, %v66
    %v71 = vmul.f32 %v67, %v67
    %v72 = vmul.f32 %v68, %v68
    %v73 = vmul.f32 %v69, %v69
    %v78 = vcombine.high %v70, %v70
    %v79 = vcombine.high %v71, %v71
    %v80 = vcombine.high %v72, %v72
    %v81 = vcombine.high %v73, %v73
    %v86 = vsel %vm34, %v70, 0.0
    %v87 = vrot.slane %v86, 4
    %v88 = vadd.f32 %v86, %v87
    %v89 = vrot.slane %v88, 2
    %v90 = vadd.f32 %v88, %v89
    %v91 = vrot.slane %v90, 1
    %v92 = vadd.f32 %v90, %v91
    %v93 = vsel %vm34, %v78, 0.0
    %v94 = vrot.slane %v93, 4
    %v95 = vadd.f32 %v93, %v94
    %v96 = vrot.slane %v95, 2
    %v97 = vadd.f32 %v95, %v96
    %v98 = vrot.slane %v97, 1
    %v99 = vadd.f32 %v97, %v98
    %v100 = vsel %vm34, %v71, 0.0
    %v101 = vrot.slane %v100, 4
    %v102 = vadd.f32 %v100, %v101
    %v103 = vrot.slane %v102, 2
    %v104 = vadd.f32 %v102, %v103
    %v105 = vrot.slane %v104, 1
    %v106 = vadd.f32 %v104, %v105
    %v107 = vsel %vm34, %v79, 0.0
    %v108 = vrot.slane %v107, 4
    %v109 = vadd.f32 %v107, %v108
    %v110 = vrot.slane %v109, 2
    %v111 = vadd.f32 %v109, %v110
    %v112 = vrot.slane %v111, 1
    %v113 = vadd.f32 %v111, %v112
    %v114 = vsel %vm34, %v72, 0.0
    %v115 = vrot.slane %v114, 4
    %v116 = vadd.f32 %v114, %v115
    %v117 = vrot.slane %v116, 2
    %v118 = vadd.f32 %v116, %v117
    %v119 = vrot.slane %v118, 1
    %v120 = vadd.f32 %v118, %v119
    %v121 = vsel %vm34, %v80, 0.0
    %v122 = vrot.slane %v121, 4
    %v123 = vadd.f32 %v121, %v122
    %v124 = vrot.slane %v123, 2
    %v125 = vadd.f32 %v123, %v124
    %v126 = vrot.slane %v125, 1
    %v127 = vadd.f32 %v125, %v126
    %v128 = vsel %vm34, %v73, 0.0
    %v129 = vrot.slane %v128, 4
    %v130 = vadd.f32 %v128, %v129
    %v131 = vrot.slane %v130, 2
    %v132 = vadd.f32 %v130, %v131
    %v133 = vrot.slane %v132, 1
    %v134 = vadd.f32 %v132, %v133
    %v135 = vsel %vm34, %v81, 0.0
    %v136 = vrot.slane %v135, 4
    %v137 = vadd.f32 %v135, %v136
    %v138 = vrot.slane %v137, 2
    %v139 = vadd.f32 %v137, %v138
    %v140 = vrot.slane %v139, 1
    %v141 = vadd.f32 %v139, %v140
    %v142 = vadd.f32 %v92, %v99
    %v143 = vadd.f32 %v142, %v106
    %v144 = vadd.f32 %v143, %v113
    %145 = vadd.xlane.f32.xlu0 %v144
    %v146 = vpop.xlane.xlu0 %145
    %v147 = vadd.f32 %v120, %v127
    %v148 = vadd.f32 %v147, %v134
    %v149 = vadd.f32 %v148, %v141
    %150 = vadd.xlane.f32.xlu0 %v149
    %v151 = vpop.xlane.xlu0 %150
    %v152 = vadd.f32 %v146, %v151
    %v153 = vmul.f32 %v152, 0.0009765625
    %v154 = vadd.f32 %v153, 1e-05
    %v155 = vrsqrt.pop %v154
    %v156 = vld [vmem:[%s1] sm:$0xf]
    %v157 = vmul.f32 %v156, %v155
    %v159 = vlaneseq
    %v160 = vshrl.u32 %v159, 7
    %v161 = vsub.s32 0, %v160
    %v162 = vrot.slane %v157, %v161
    %v163 = vlaneseq
    %v164 = vshrl.u32 %v163, 7
    %v165 = vsub.s32 1, %v164
    %v166 = vrot.slane %v157, %v165
    %v167 = vlaneseq
    %v168 = vshrl.u32 %v167, 7
    %v169 = vsub.s32 2, %v168
    %v170 = vrot.slane %v157, %v169
    %v171 = vlaneseq
    %v172 = vshrl.u32 %v171, 7
    %v173 = vsub.s32 3, %v172
    %v174 = vrot.slane %v157, %v173
    %v183 = vcombine.high %v66, %v66
    %v184 = vcombine.high %v67, %v67
    %v185 = vcombine.high %v68, %v68
    %v186 = vcombine.high %v69, %v69
    %v191 = vmul.f32 %v162, %v66
    %v192 = vmul.f32 %v166, %v183
    %v193 = vmul.f32 %v170, %v67
    %v194 = vmul.f32 %v174, %v184
    %v195 = vmul.f32 %v162, %v68
    %v196 = vmul.f32 %v166, %v185
    %v197 = vmul.f32 %v170, %v69
    %v198 = vmul.f32 %v174, %v186
    %v199 = vld [vmem:[%s2] sm:$0xff]
    %v200 = vld [vmem:[%s2 + $0x8] sm:$0xff]
    %v203 = vcombine.high %v199, %v199
    %v204 = vcombine.high %v200, %v200
    %v207 = vadd.f32 %v191, %v199
    %v208 = vadd.f32 %v192, %v203
    %v209 = vadd.f32 %v193, %v200
    %v210 = vadd.f32 %v194, %v204
    %v211 = vadd.f32 %v195, %v199
    %v212 = vadd.f32 %v196, %v203
    %v213 = vadd.f32 %v197, %v200
    %v214 = vadd.f32 %v198, %v204
    %v223 = vcombine.low %v207, %v208
    %v224 = vcombine.low %v209, %v210
    %v225 = vcombine.low %v211, %v212
    %v226 = vcombine.low %v213, %v214
    %231 = vst [vmem:[%s3] sm:$0xff] %v223
    %232 = vst [vmem:[%s3 + $0x8] sm:$0xff] %v224
    %233 = vst [vmem:[%s3 + $0x10] sm:$0xff] %v225
    %234 = vst [vmem:[%s3 + $0x18] sm:$0xff] %v226
    %vm235 = vcmask 3072
    %236 = vst.msk [vmem:[%s4] sm:$0xf] %vm235, %v56
    %vm237 = vcmask 0
    %238 = vst.msk [vmem:[#allocation2] sm:$0x1] %vm237, %v153
    // Predicated region
    $region14: #{quaternion_batchnorm2d.1} parent=1 // pred_check
      _
    $region15: #{quaternion_batchnorm2d.1} parent=1 // pred_check_branch
      %240 = sbr.rel (0) target = $region17
    $region16: #{quaternion_batchnorm2d.1} parent=1 // pred_region
      _
    $region17: #{quaternion_batchnorm2d.1} parent=1 // pred_fallthru
      _
    // Predicated region
    $region18: #{quaternion_batchnorm2d.1} parent=1 // pred_check
      _
    $region19: #{quaternion_batchnorm2d.1} parent=1 // pred_check_branch
      %242 = sbr.rel (0) target = $region21
    $region20: #{quaternion_batchnorm2d.1} parent=1 // pred_region
      _
    $region21: #{quaternion_batchnorm2d.1} parent=1 // pred_fallthru
      _
    // Predicated region
    $region22: #{quaternion_batchnorm2d.1} parent=1 // pred_check
      _
    $region23: #{quaternion_batchnorm2d.1} parent=1 // pred_check_branch
      %244 = sbr.rel (0) target = $region25
    $region24: #{quaternion_batchnorm2d.1} parent=1 // pred_region
      %s246 = ssub.s32 16, 16
      %247 = vsyncadd [#allocation3], %s246
      %s249 = sshll.u32 [#allocation2], 4
      %s250 = int_to_ptr.vmem [resolvable:$true] %s249
      %252 = dma.vmem_to_hbm [thread:$0]  %s250, 16, %s5, [#allocation3]
    $region25: #{quaternion_batchnorm2d.1} parent=1 // pred_fallthru
      _
    // Predicated region
    $region26: #{quaternion_batchnorm2d.1} parent=1 // pred_check
      _
    $region27: #{quaternion_batchnorm2d.1} parent=1 // pred_check_branch
      %254 = sbr.rel (0) target = $region29
    $region28: #{quaternion_batchnorm2d.1} parent=1 // pred_region
      _
    $region29: #{quaternion_batchnorm2d.1} parent=1 // pred_fallthru
      _
    // Predicated region
    $region30: #{quaternion_batchnorm2d.1} parent=1 // pred_check
      _
    $region31: #{quaternion_batchnorm2d.1} parent=1 // pred_check_branch
      %256 = sbr.rel (0) target = $region33
    $region32: #{quaternion_batchnorm2d.1} parent=1 // pred_region
      _
    $region33: #{quaternion_batchnorm2d.1} parent=1 // pred_fallthru
      _
    // Predicated region
    $region34: #{quaternion_batchnorm2d.1} parent=1 // pred_check
      _
    $region35: #{quaternion_batchnorm2d.1} parent=1 // pred_check_branch
      %258 = sbr.rel (0) target = $region37
    $region36: #{quaternion_batchnorm2d.1} parent=1 // pred_region
      %259 = dma.done [#allocation3], 16
    $region37: #{quaternion_batchnorm2d.1} parent=1 // pred_fallthru
      _
    %260 = vsyncpa [#allocation3], 1

</llo_original>
